<compile_context>
chip_gen: v7x
topology: tpu7x:2x2x1
jax: 0.10.0
libtpu: 0.0.40
codegen_flags: <defaults>
</compile_context>

<pallas_src>
import jax
import jax.numpy as jnp
from jax.experimental import pallas as pl
from jax.experimental.pallas import tpu as pltpu


# SmallConvNet channel sizes: input_dim -> 8 -> 4 -> 2, all 1x1 convs.
_CONV_DIMS = (8, 4, 2)
_STRIDES = (1, 2, 2)

# VMEM budget per grid step (double-buffered in+out blocks + in-kernel
# intermediates).  12 MiB keeps us safely inside v5e's 16 MiB default scoped
# VMEM while still making each step move MBs, not KBs.
_VMEM_BUDGET_BYTES = 12 * 1024 * 1024


# --------------------------------- Kernel ---------------------------------- #
def _channel_mix_vpu(x, w, b):
    """Pointwise (1x1-conv) channel mix on the VPU.

    x: (Cin, TP) f32 -- pixels on the lane axis, channels on sublanes
    w: (Cout, Cin)   -- PyTorch Conv2d weight with the 1x1 dims squeezed
    b: (Cout, 1)
    returns (Cout, TP) with out[co, p] = sum_ci w[co, ci] * x[ci, p] + b[co].

    Cin is only 2..8 here, so an unrolled broadcast-FMA chain beats pushing a
    tiny-K contraction through the MXU.
    """
    cin = x.shape[0]
    acc = w[:, 0:1] * x[0:1, :]
    for ci in range(1, cin):
        acc = acc + w[:, ci:ci + 1] * x[ci:ci + 1, :]
    return acc + b


def _fused_convnet_kernel(x_ref, p_ref, o_ref):
    # x_ref: (1, C0, TP) pixel block; p_ref: (24, L) packed weight/bias slab;
    # o_ref: (1, C3, TP).
    c1, c2, c3 = _CONV_DIMS
    c0 = x_ref.shape[1]

    x = x_ref[0].astype(jnp.float32)                      # (C0, TP)

    # Static slices of the resident slab (each layer is 8-sublane aligned).
    w1 = p_ref[0:c1, 0:c0]
    b1 = p_ref[0:c1, c0:c0 + 1]
    w2 = p_ref[8:8 + c2, 0:c1]
    b2 = p_ref[8:8 + c2, c1:c1 + 1]
    w3 = p_ref[16:16 + c3, 0:c2]
    b3 = p_ref[16:16 + c3, c2:c2 + 1]

    h = _channel_mix_vpu(x, w1, b1)                       # conv1: (8, TP)
    h = _channel_mix_vpu(h, w2, b2)                       # conv2: (4, TP)
    h = _channel_mix_vpu(h, w3, b3)                       # conv3: (2, TP)

    o_ref[0] = h.astype(o_ref.dtype)


# ------------------------------ Param helpers ------------------------------ #
def init_params(key, input_dim):
    """Deterministic params matching SmallConvNet shapes.

    Weights stored PyTorch-style as (Cout, Cin) (the 1x1 Conv2d weight with
    the trailing 1x1 dims squeezed); biases as (Cout,).
    """
    dims = (input_dim,) + _CONV_DIMS
    params = []
    for i in range(3):
        cin, cout = dims[i], dims[i + 1]
        key, kw, kb = jax.random.split(key, 3)
        bound = 1.0 / (cin ** 0.5)  # PyTorch default uniform(-1/sqrt(fan_in), ..)
        w = jax.random.uniform(kw, (cout, cin), jnp.float32, -bound, bound)
        b = jax.random.uniform(kb, (cout,), jnp.float32, -bound, bound)
        params.append((w, b))
    return params


def _pack_params(params):
    """Pack W1,b1,W2,b2,W3,b3 into one (24, L) f32 slab (one resident operand).

    Layer i lives in sublane rows [8*i, 8*i + Cout_i): cols [0, Cin_i) hold W_i
    and col Cin_i holds b_i.  8-sublane alignment per layer keeps the in-kernel
    static slices trivial.
    """
    l = max(w.shape[1] for w, _ in params) + 1
    blocks = []
    for w, b in params:
        cout, cin = w.shape
        blk = jnp.zeros((8, l), jnp.float32)
        blk = blk.at[:cout, :cin].set(w.astype(jnp.float32))
        blk = blk.at[:cout, cin].set(b.astype(jnp.float32))
        blocks.append(blk)
    return jnp.concatenate(blocks, axis=0)                # (24, L)


def _pick_tile_p(p, c0, n):
    """Pixel-tile size: as large as the VMEM budget allows, >=2 grid steps."""
    c1, c2, c3 = _CONV_DIMS
    # f32 bytes per lane of tile: double-buffered in+out + (C1,TP)/(C2,TP) temps.
    bytes_per_lane = 4 * (2 * (c0 + c3) + c1 + c2)
    cap = max(128, (_VMEM_BUDGET_BYTES // bytes_per_lane) // 128 * 128)
    tile = p if p <= cap else cap                          # full P or 128-multiple
    # v7x has 2 TensorCores: make sure there are >=2 parallel steps when we can.
    if n * pl.cdiv(p, tile) < 2 and p >= 256:
        tile = (pl.cdiv(p, 2) + 127) // 128 * 128
    return tile


# ------------------------------ Model wrapper ------------------------------ #
@jax.jit
def small_conv_net_forward(params, x_nchw):
    """conv1(s=1) -> conv2(s=2) -> conv3(s=2). NCHW in / NCHW out."""
    n, c0, _, _ = x_nchw.shape
    c3 = _CONV_DIMS[-1]

    # 1x1 kernels + pointwise layers: a stride-s conv is exactly
    # "subsample the spatial grid by s, then channel-mix", so the composed
    # stride 1*2*2 = 4 is applied to the input ONCE.  This strided slice is the
    # only wrapper-side data movement; the reshapes below are trailing-dim
    # merges/splits and therefore layout-preserving (free).
    xs = x_nchw[:, :, ::4, ::4]                            # (N, C0, Ho, Wo)
    ho, wo = xs.shape[2], xs.shape[3]
    p = ho * wo
    xs3 = xs.reshape(n, c0, p)                             # (N, C0, P), free

    slab = _pack_params(params)                            # (24, L) resident

    tile_p = _pick_tile_p(p, c0, n)
    grid = (n, pl.cdiv(p, tile_p))
    # NOTE: if P is not a multiple of tile_p, the last pixel tile is padded on
    # read and masked on write by Pallas (tile_p is then a multiple of 128, so
    # the block is legal); the padded lanes never reach HBM.

    out = pl.pallas_call(
        _fused_convnet_kernel,
        out_shape=jax.ShapeDtypeStruct((n, c3, p), x_nchw.dtype),
        grid=grid,
        in_specs=[
            pl.BlockSpec((1, c0, tile_p), lambda i, j: (i, 0, j)),
            pl.BlockSpec(slab.shape, lambda i, j: (0, 0)),  # resident slab
        ],
        out_specs=pl.BlockSpec((1, c3, tile_p), lambda i, j: (i, 0, j)),
        compiler_params=pltpu.CompilerParams(
            dimension_semantics=("parallel", "parallel"),
            vmem_limit_bytes=32 * 1024 * 1024),
    )(xs3, slab)

    # (N, C3, Ho*Wo) -> (N, C3, Ho, Wo): trailing-dim split, free.
    return out.reshape(n, c3, ho, wo)


# ------------------------------- Reference --------------------------------- #
def _reference_forward(params, x_nchw):
    """Pure-JAX per-layer reference (explicit per-layer striding)."""
    x = x_nchw
    for (w, b), s in zip(params, _STRIDES):
        if s > 1:
            x = x[:, :, ::s, ::s]
        x = jnp.einsum("nchw,dc->ndhw", x, w) + b[None, :, None, None]
    return x


if __name__ == "__main__":
    key = jax.random.PRNGKey(0)
    k_param, k_x = jax.random.split(key)

    input_dim = 4
    params = init_params(k_param, input_dim)

    # x: [N=2, C=4, H=16, W=16]  (NCHW, PyTorch convention)
    x = jax.random.normal(k_x, (2, input_dim, 16, 16), dtype=jnp.float32)

    y = jax.block_until_ready(small_conv_net_forward(params, x))

    # conv1: (2,8,16,16) -> conv2 s=2: (2,4,8,8) -> conv3 s=2: (2,2,4,4)
    assert y.shape == (2, 2, 4, 4), y.shape

    y_ref = _reference_forward(params, x)
    assert jnp.allclose(y, y_ref, rtol=1e-5, atol=1e-5), float(
        jnp.max(jnp.abs(y - y_ref)))

    print("KERNEL_OK")
</pallas_src>

<mosaic_0001>
module attributes {stable_mosaic.version = 11 : i64} {
  func.func @_fused_convnet_kernel(%arg0: i32, %arg1: i32, %arg2: memref<1x4x16xf32, #tpu.memory_space<vmem>>, %arg3: memref<24x9xf32, #tpu.memory_space<vmem>>, %arg4: memref<1x2x16xf32, #tpu.memory_space<vmem>>) attributes {dimension_semantics = [#tpu.dimension_semantics<parallel>, #tpu.dimension_semantics<parallel>], iteration_bounds = array<i64: 2, 1>, scalar_prefetch = 0 : i64, scratch_operands = 0 : i64, tpu.core_type = #tpu.core_type<tc>, window_params = [{transform_indices = @transform_0, window_bounds = array<i64: 1, 4, 16>}, {pipeline_mode = #tpu.pipeline_mode<synchronous>, transform_indices = @transform_1, window_bounds = array<i64: 24, 9>}, {transform_indices = @transform_2, window_bounds = array<i64: 1, 2, 16>}]} {
    %c0 = arith.constant 0 : index
    %c0_0 = arith.constant 0 : index
    %c0_1 = arith.constant 0 : index
    %0 = vector.load %arg2[%c0, %c0_0, %c0_1] : memref<1x4x16xf32, #tpu.memory_space<vmem>>, vector<1x4x16xf32>
    %1 = vector.shape_cast %0 : vector<1x4x16xf32> to vector<4x16xf32>
    %c0_2 = arith.constant 0 : index
    %c0_3 = arith.constant 0 : index
    %2 = vector.load %arg3[%c0_2, %c0_3] : memref<24x9xf32, #tpu.memory_space<vmem>>, vector<8x4xf32>
    %c0_4 = arith.constant 0 : index
    %c4 = arith.constant 4 : index
    %3 = vector.load %arg3[%c0_4, %c4] : memref<24x9xf32, #tpu.memory_space<vmem>>, vector<8x1xf32>
    %c8 = arith.constant 8 : index
    %c0_5 = arith.constant 0 : index
    %4 = vector.load %arg3[%c8, %c0_5] : memref<24x9xf32, #tpu.memory_space<vmem>>, vector<4x8xf32>
    %c8_6 = arith.constant 8 : index
    %c8_7 = arith.constant 8 : index
    %5 = vector.load %arg3[%c8_6, %c8_7] : memref<24x9xf32, #tpu.memory_space<vmem>>, vector<4x1xf32>
    %c16 = arith.constant 16 : index
    %c0_8 = arith.constant 0 : index
    %6 = vector.load %arg3[%c16, %c0_8] : memref<24x9xf32, #tpu.memory_space<vmem>>, vector<2x4xf32>
    %c16_9 = arith.constant 16 : index
    %c4_10 = arith.constant 4 : index
    %7 = vector.load %arg3[%c16_9, %c4_10] : memref<24x9xf32, #tpu.memory_space<vmem>>, vector<2x1xf32>
    %8 = vector.extract_strided_slice %2 {offsets = [0, 0], sizes = [8, 1], strides = [1, 1]} : vector<8x4xf32> to vector<8x1xf32>
    %9 = vector.extract_strided_slice %1 {offsets = [0, 0], sizes = [1, 16], strides = [1, 1]} : vector<4x16xf32> to vector<1x16xf32>
    %10 = vector.broadcast %8 : vector<8x1xf32> to vector<8x16xf32>
    %11 = vector.broadcast %9 : vector<1x16xf32> to vector<8x16xf32>
    %12 = arith.mulf %10, %11 : vector<8x16xf32>
    %13 = vector.extract_strided_slice %2 {offsets = [0, 1], sizes = [8, 1], strides = [1, 1]} : vector<8x4xf32> to vector<8x1xf32>
    %14 = vector.extract_strided_slice %1 {offsets = [1, 0], sizes = [1, 16], strides = [1, 1]} : vector<4x16xf32> to vector<1x16xf32>
    %15 = vector.broadcast %13 : vector<8x1xf32> to vector<8x16xf32>
    %16 = vector.broadcast %14 : vector<1x16xf32> to vector<8x16xf32>
    %17 = arith.mulf %15, %16 : vector<8x16xf32>
    %18 = arith.addf %12, %17 : vector<8x16xf32>
    %19 = vector.extract_strided_slice %2 {offsets = [0, 2], sizes = [8, 1], strides = [1, 1]} : vector<8x4xf32> to vector<8x1xf32>
    %20 = vector.extract_strided_slice %1 {offsets = [2, 0], sizes = [1, 16], strides = [1, 1]} : vector<4x16xf32> to vector<1x16xf32>
    %21 = vector.broadcast %19 : vector<8x1xf32> to vector<8x16xf32>
    %22 = vector.broadcast %20 : vector<1x16xf32> to vector<8x16xf32>
    %23 = arith.mulf %21, %22 : vector<8x16xf32>
    %24 = arith.addf %18, %23 : vector<8x16xf32>
    %25 = vector.extract_strided_slice %2 {offsets = [0, 3], sizes = [8, 1], strides = [1, 1]} : vector<8x4xf32> to vector<8x1xf32>
    %26 = vector.extract_strided_slice %1 {offsets = [3, 0], sizes = [1, 16], strides = [1, 1]} : vector<4x16xf32> to vector<1x16xf32>
    %27 = vector.broadcast %25 : vector<8x1xf32> to vector<8x16xf32>
    %28 = vector.broadcast %26 : vector<1x16xf32> to vector<8x16xf32>
    %29 = arith.mulf %27, %28 : vector<8x16xf32>
    %30 = arith.addf %24, %29 : vector<8x16xf32>
    %31 = vector.broadcast %3 : vector<8x1xf32> to vector<8x16xf32>
    %32 = arith.addf %30, %31 : vector<8x16xf32>
    %33 = vector.extract_strided_slice %4 {offsets = [0, 0], sizes = [4, 1], strides = [1, 1]} : vector<4x8xf32> to vector<4x1xf32>
    %34 = vector.extract_strided_slice %32 {offsets = [0, 0], sizes = [1, 16], strides = [1, 1]} : vector<8x16xf32> to vector<1x16xf32>
    %35 = vector.broadcast %33 : vector<4x1xf32> to vector<4x16xf32>
    %36 = vector.broadcast %34 : vector<1x16xf32> to vector<4x16xf32>
    %37 = arith.mulf %35, %36 : vector<4x16xf32>
    %38 = vector.extract_strided_slice %4 {offsets = [0, 1], sizes = [4, 1], strides = [1, 1]} : vector<4x8xf32> to vector<4x1xf32>
    %39 = vector.extract_strided_slice %32 {offsets = [1, 0], sizes = [1, 16], strides = [1, 1]} : vector<8x16xf32> to vector<1x16xf32>
    %40 = vector.broadcast %38 : vector<4x1xf32> to vector<4x16xf32>
    %41 = vector.broadcast %39 : vector<1x16xf32> to vector<4x16xf32>
    %42 = arith.mulf %40, %41 : vector<4x16xf32>
    %43 = arith.addf %37, %42 : vector<4x16xf32>
    %44 = vector.extract_strided_slice %4 {offsets = [0, 2], sizes = [4, 1], strides = [1, 1]} : vector<4x8xf32> to vector<4x1xf32>
    %45 = vector.extract_strided_slice %32 {offsets = [2, 0], sizes = [1, 16], strides = [1, 1]} : vector<8x16xf32> to vector<1x16xf32>
    %46 = vector.broadcast %44 : vector<4x1xf32> to vector<4x16xf32>
    %47 = vector.broadcast %45 : vector<1x16xf32> to vector<4x16xf32>
    %48 = arith.mulf %46, %47 : vector<4x16xf32>
    %49 = arith.addf %43, %48 : vector<4x16xf32>
    %50 = vector.extract_strided_slice %4 {offsets = [0, 3], sizes = [4, 1], strides = [1, 1]} : vector<4x8xf32> to vector<4x1xf32>
    %51 = vector.extract_strided_slice %32 {offsets = [3, 0], sizes = [1, 16], strides = [1, 1]} : vector<8x16xf32> to vector<1x16xf32>
    %52 = vector.broadcast %50 : vector<4x1xf32> to vector<4x16xf32>
    %53 = vector.broadcast %51 : vector<1x16xf32> to vector<4x16xf32>
    %54 = arith.mulf %52, %53 : vector<4x16xf32>
    %55 = arith.addf %49, %54 : vector<4x16xf32>
    %56 = vector.extract_strided_slice %4 {offsets = [0, 4], sizes = [4, 1], strides = [1, 1]} : vector<4x8xf32> to vector<4x1xf32>
    %57 = vector.extract_strided_slice %32 {offsets = [4, 0], sizes = [1, 16], strides = [1, 1]} : vector<8x16xf32> to vector<1x16xf32>
    %58 = vector.broadcast %56 : vector<4x1xf32> to vector<4x16xf32>
    %59 = vector.broadcast %57 : vector<1x16xf32> to vector<4x16xf32>
    %60 = arith.mulf %58, %59 : vector<4x16xf32>
    %61 = arith.addf %55, %60 : vector<4x16xf32>
    %62 = vector.extract_strided_slice %4 {offsets = [0, 5], sizes = [4, 1], strides = [1, 1]} : vector<4x8xf32> to vector<4x1xf32>
    %63 = vector.extract_strided_slice %32 {offsets = [5, 0], sizes = [1, 16], strides = [1, 1]} : vector<8x16xf32> to vector<1x16xf32>
    %64 = vector.broadcast %62 : vector<4x1xf32> to vector<4x16xf32>
    %65 = vector.broadcast %63 : vector<1x16xf32> to vector<4x16xf32>
    %66 = arith.mulf %64, %65 : vector<4x16xf32>
    %67 = arith.addf %61, %66 : vector<4x16xf32>
    %68 = vector.extract_strided_slice %4 {offsets = [0, 6], sizes = [4, 1], strides = [1, 1]} : vector<4x8xf32> to vector<4x1xf32>
    %69 = vector.extract_strided_slice %32 {offsets = [6, 0], sizes = [1, 16], strides = [1, 1]} : vector<8x16xf32> to vector<1x16xf32>
    %70 = vector.broadcast %68 : vector<4x1xf32> to vector<4x16xf32>
    %71 = vector.broadcast %69 : vector<1x16xf32> to vector<4x16xf32>
    %72 = arith.mulf %70, %71 : vector<4x16xf32>
    %73 = arith.addf %67, %72 : vector<4x16xf32>
    %74 = vector.extract_strided_slice %4 {offsets = [0, 7], sizes = [4, 1], strides = [1, 1]} : vector<4x8xf32> to vector<4x1xf32>
    %75 = vector.extract_strided_slice %32 {offsets = [7, 0], sizes = [1, 16], strides = [1, 1]} : vector<8x16xf32> to vector<1x16xf32>
    %76 = vector.broadcast %74 : vector<4x1xf32> to vector<4x16xf32>
    %77 = vector.broadcast %75 : vector<1x16xf32> to vector<4x16xf32>
    %78 = arith.mulf %76, %77 : vector<4x16xf32>
    %79 = arith.addf %73, %78 : vector<4x16xf32>
    %80 = vector.broadcast %5 : vector<4x1xf32> to vector<4x16xf32>
    %81 = arith.addf %79, %80 : vector<4x16xf32>
    %82 = vector.extract_strided_slice %6 {offsets = [0, 0], sizes = [2, 1], strides = [1, 1]} : vector<2x4xf32> to vector<2x1xf32>
    %83 = vector.extract_strided_slice %81 {offsets = [0, 0], sizes = [1, 16], strides = [1, 1]} : vector<4x16xf32> to vector<1x16xf32>
    %84 = vector.broadcast %82 : vector<2x1xf32> to vector<2x16xf32>
    %85 = vector.broadcast %83 : vector<1x16xf32> to vector<2x16xf32>
    %86 = arith.mulf %84, %85 : vector<2x16xf32>
    %87 = vector.extract_strided_slice %6 {offsets = [0, 1], sizes = [2, 1], strides = [1, 1]} : vector<2x4xf32> to vector<2x1xf32>
    %88 = vector.extract_strided_slice %81 {offsets = [1, 0], sizes = [1, 16], strides = [1, 1]} : vector<4x16xf32> to vector<1x16xf32>
    %89 = vector.broadcast %87 : vector<2x1xf32> to vector<2x16xf32>
    %90 = vector.broadcast %88 : vector<1x16xf32> to vector<2x16xf32>
    %91 = arith.mulf %89, %90 : vector<2x16xf32>
    %92 = arith.addf %86, %91 : vector<2x16xf32>
    %93 = vector.extract_strided_slice %6 {offsets = [0, 2], sizes = [2, 1], strides = [1, 1]} : vector<2x4xf32> to vector<2x1xf32>
    %94 = vector.extract_strided_slice %81 {offsets = [2, 0], sizes = [1, 16], strides = [1, 1]} : vector<4x16xf32> to vector<1x16xf32>
    %95 = vector.broadcast %93 : vector<2x1xf32> to vector<2x16xf32>
    %96 = vector.broadcast %94 : vector<1x16xf32> to vector<2x16xf32>
    %97 = arith.mulf %95, %96 : vector<2x16xf32>
    %98 = arith.addf %92, %97 : vector<2x16xf32>
    %99 = vector.extract_strided_slice %6 {offsets = [0, 3], sizes = [2, 1], strides = [1, 1]} : vector<2x4xf32> to vector<2x1xf32>
    %100 = vector.extract_strided_slice %81 {offsets = [3, 0], sizes = [1, 16], strides = [1, 1]} : vector<4x16xf32> to vector<1x16xf32>
    %101 = vector.broadcast %99 : vector<2x1xf32> to vector<2x16xf32>
    %102 = vector.broadcast %100 : vector<1x16xf32> to vector<2x16xf32>
    %103 = arith.mulf %101, %102 : vector<2x16xf32>
    %104 = arith.addf %98, %103 : vector<2x16xf32>
    %105 = vector.broadcast %7 : vector<2x1xf32> to vector<2x16xf32>
    %106 = arith.addf %104, %105 : vector<2x16xf32>
    %c0_11 = arith.constant 0 : index
    %c0_12 = arith.constant 0 : index
    %c0_13 = arith.constant 0 : index
    %107 = vector.load %arg4[%c0_11, %c0_12, %c0_13] : memref<1x2x16xf32, #tpu.memory_space<vmem>>, vector<1x2x16xf32>
    %108 = vector.shape_cast %107 : vector<1x2x16xf32> to vector<2x16xf32>
    %109 = vector.shape_cast %106 : vector<2x16xf32> to vector<1x2x16xf32>
    tpu.vector_store %arg4[%c0_11, %c0_12, %c0_13], %109 {strides = array<i32>} : memref<1x2x16xf32, #tpu.memory_space<vmem>>, vector<1x2x16xf32>,
    return
  }
  func.func @transform_0(%arg0: i32, %arg1: i32) -> (i32, i32, i32) {
    %c0_i32 = arith.constant 0 : i32
    %c0_i32_0 = arith.constant 0 : i32
    return %arg0, %c0_i32, %arg1 : i32, i32, i32
  }
  func.func @transform_1(%arg0: i32, %arg1: i32) -> (i32, i32) {
    %c0_i32 = arith.constant 0 : i32
    %c0_i32_0 = arith.constant 0 : i32
    %c0_i32_1 = arith.constant 0 : i32
    return %c0_i32, %c0_i32_0 : i32, i32
  }
  func.func @transform_2(%arg0: i32, %arg1: i32) -> (i32, i32, i32) {
    %c0_i32 = arith.constant 0 : i32
    %c0_i32_0 = arith.constant 0 : i32
    return %arg0, %c0_i32, %arg1 : i32, i32, i32
  }
}

</mosaic_0001>

<llo_original>
// kernel: small_conv_net_forward.1
$region0: #{small_conv_net_forward.1}
  #allocation0 [shape = 'u32[]', space=smem, size = 0x4, offset = 0x4, fixed_abs, tag = 'smem constant byte address 0x4 - core index']
  #allocation1 [shape = 'u32[144,128]{1,0:T(1,128)}', space=vmem, size = 0x12000, scoped, tag = 'internal scratch']
  %s0 = inlined_call_operand.vmem [shape: f32[2,4,16], index: 0, kind: input, shape index: {}]
  %s1 = inlined_call_operand.vmem [shape: f32[24,9], index: 1, kind: input, shape index: {}]
  %s2 = inlined_call_operand.vmem [shape: f32[2,2,16], index: 2, kind: output, shape index: {}]
  %s3 = sld [smem:[#allocation0]]
  $region41: #{small_conv_net_forward.1} parent=0
    _
  %s5 = ssub.s32 1, %s3
  %s6 = scalar_select 0, %s5, %s3
  loop: start=0, step=1, limit=4
  $region2: #{small_conv_net_forward.1} parent=0 // loop_pre_header
    _
  $region3: #{small_conv_net_forward.1} parent=0 // loop_header
    %s8 = sphi 0, %s12
    %p9 = scmp.ge.s32.totalorder %s8, 4
    %s15 = sphi 0, %s27
    %s16 = sphi 0, %s23
    %s17 = sphi 0, %s15
    %s18 = sphi 0, %s16
    %s19 = sphi 0, %s17
    %s20 = sphi 0, %s18
    %s32 = sphi 0, %s34
    %s35 = sphi 0, %s32
    %s36 = sphi 0, %s35
    %s52 = sphi 0, %s36
    %s56 = sphi 0, %s56
    %s58 = sphi 0, %s56
    %s59 = sphi 0, %s58
    %s73 = sphi 0, %s59
    %s81 = sphi 0, %s83
    %s84 = sphi 0, %s81
    %s85 = sphi 0, %s84
    %s101 = sphi 0, %s85
  $region4: #{small_conv_net_forward.1} parent=0 // loop_header_branch
    %11 = sbr.rel (%p9) target = $region8
  $region5: #{small_conv_net_forward.1} parent=0 // loop_body
    %s13 = ssub.s32 %s8, 1
    %s14 = ssub.s32 %s8, 2
    %s21 = sadd.s32 1, %s16
    %p22 = scmp.ge.s32.totalorder %s21, 1
    %s23 = scalar_select %p22, 0, %s21
    %s24 = sadd.s32 1, %s15
    %s25 = scalar_select %p22, %s24, %s15
    %p26 = scmp.ge.s32.totalorder %s25, 2
    %s27 = scalar_select %p26, 0, %s25
    %s28 = ssub.s32 %s15, %s27
    %s29 = ssub.s32 %s16, %s23
    %s30 = sor.u32 %s28, %s29
    %p31 = scmp.eq.s32.totalorder %s30, 0
    %s33 = sadd.s32 %s32, 1
    %s34 = scalar_select %p31, %s32, %s33
    %p37 = pneg %p31
    %p38 = scmp.eq.s32.totalorder %s8, 1
    %p39 = por %p37, %p38
    %p40 = scmp.ne.s32.totalorder %s32, %s35
    %p41 = scmp.eq.s32.totalorder %s8, 0
    %p42 = por %p40, %p41
    %p43 = scmp.ne.s32.totalorder %s32, %s35
    %p44 = scmp.eq.s32.totalorder %s13, 1
    %p45 = por %p43, %p44
    %p46 = scmp.ne.s32.totalorder %s35, %s36
    %p47 = scmp.eq.s32.totalorder %s13, 0
    %p48 = por %p46, %p47
    %p49 = scmp.ne.s32.totalorder %s35, %s36
    %p50 = scmp.eq.s32.totalorder %s14, 1
    %p51 = por %p49, %p50
    %p53 = scmp.ne.s32.totalorder %s36, %s52
    %p54 = scmp.eq.s32.totalorder %s14, 0
    %p55 = por %p53, %p54
    %s57 = sadd.s32 %s56, 1
    %p60 = scmp.eq.s32.totalorder %s8, 1
    %p61 = scmp.ne.s32.totalorder %s56, %s58
    %p62 = scmp.eq.s32.totalorder %s8, 0
    %p63 = por %p61, %p62
    %p64 = scmp.ne.s32.totalorder %s56, %s58
    %p65 = scmp.eq.s32.totalorder %s13, 1
    %p66 = por %p64, %p65
    %p67 = scmp.ne.s32.totalorder %s58, %s59
    %p68 = scmp.eq.s32.totalorder %s13, 0
    %p69 = por %p67, %p68
    %p70 = scmp.ne.s32.totalorder %s58, %s59
    %p71 = scmp.eq.s32.totalorder %s14, 1
    %p72 = por %p70, %p71
    %p74 = scmp.ne.s32.totalorder %s59, %s73
    %p75 = scmp.eq.s32.totalorder %s14, 0
    %p76 = por %p74, %p75
    %s77 = ssub.s32 %s15, %s27
    %s78 = ssub.s32 %s16, %s23
    %s79 = sor.u32 %s77, %s78
    %p80 = scmp.eq.s32.totalorder %s79, 0
    %s82 = sadd.s32 %s81, 1
    %s83 = scalar_select %p80, %s81, %s82
    %p86 = pneg %p80
    %p87 = scmp.eq.s32.totalorder %s8, 1
    %p88 = por %p86, %p87
    %p89 = scmp.ne.s32.totalorder %s81, %s84
    %p90 = scmp.eq.s32.totalorder %s8, 0
    %p91 = por %p89, %p90
    %p92 = scmp.ne.s32.totalorder %s81, %s84
    %p93 = scmp.eq.s32.totalorder %s13, 1
    %p94 = por %p92, %p93
    %p95 = scmp.ne.s32.totalorder %s84, %s85
    %p96 = scmp.eq.s32.totalorder %s13, 0
    %p97 = por %p95, %p96
    %p98 = scmp.ne.s32.totalorder %s84, %s85
    %p99 = scmp.eq.s32.totalorder %s14, 1
    %p100 = por %p98, %p99
    %p102 = scmp.ne.s32.totalorder %s85, %s101
    %p103 = scmp.eq.s32.totalorder %s14, 0
    %p104 = por %p102, %p103
    %p105 = scmp.le.s32.totalorder 1, %s8
    %p106 = scmp.lt.s32.totalorder %s8, 3
    %p107 = pnand %p105, %p106
    %p108 = pneg %p107
    // Predicated region
    $region9: #{small_conv_net_forward.1} parent=5 // pred_check
      _
    $region10: #{small_conv_net_forward.1} parent=5 // pred_check_branch
      %110 = sbr.rel (%p107) target = $region12
    $region11: #{small_conv_net_forward.1} parent=5 // pred_region
      %s111 = ssub.s32 %s8, 1
      // Predicated region
      $region13: #{small_conv_net_forward.1} parent=11 // pred_check
        %p112 = pneg %p69
      $region14: #{small_conv_net_forward.1} parent=11 // pred_check_branch
        %114 = sbr.rel (%p112) target = $region16
      $region15: #{small_conv_net_forward.1} parent=11 // pred_region
        _
      $region16: #{small_conv_net_forward.1} parent=11 // pred_fallthru
        _
    $region12: #{small_conv_net_forward.1} parent=5 // pred_fallthru
      _
    %p115 = scmp.lt.s32.totalorder %s8, 2
    // Predicated region
    $region17: #{small_conv_net_forward.1} parent=5 // pred_check
      %p116 = pneg %p115
    $region18: #{small_conv_net_forward.1} parent=5 // pred_check_branch
      %118 = sbr.rel (%p116) target = $region20
    $region19: #{small_conv_net_forward.1} parent=5 // pred_region
      // Predicated region
      $region21: #{small_conv_net_forward.1} parent=19 // pred_check
        %p119 = pneg %p42
      $region22: #{small_conv_net_forward.1} parent=19 // pred_check_branch
        %121 = sbr.rel (%p119) target = $region24
      $region23: #{small_conv_net_forward.1} parent=19 // pred_region
        %p122 = scmp.lt.s32.totalorder %s15, 1
        %s123 = scalar_select %p122, %s15, 1
        %p124 = scmp.lt.s32.totalorder %s16, 0
        %s125 = scalar_select %p124, %s16, 0
        %s126 = sadd.s32 %s125, %s123
        %s127 = smul.addr %s126, 4
        %s128 = scalar_lea.vmem %s0, %s127
      $region24: #{small_conv_net_forward.1} parent=19 // pred_fallthru
        _
    $region20: #{small_conv_net_forward.1} parent=5 // pred_fallthru
      _
    %p129 = scmp.le.s32.totalorder 1, %s8
    %p130 = scmp.lt.s32.totalorder %s8, 3
    %p131 = pnand %p129, %p130
    %p132 = pneg %p131
    // Predicated region
    $region25: #{small_conv_net_forward.1} parent=5 // pred_check
      _
    $region26: #{small_conv_net_forward.1} parent=5 // pred_check_branch
      %134 = sbr.rel (%p131) target = $region28
    $region27: #{small_conv_net_forward.1} parent=5 // pred_region
      %s135 = ssub.s32 %s8, 1
      %p136 = scmp.lt.s32.totalorder %s17, 1
      %s137 = scalar_select %p136, %s17, 1
      %p138 = scmp.lt.s32.totalorder %s18, 0
      %s139 = scalar_select %p138, %s18, 0
      %s140 = sadd.s32 %s139, %s137
      %s141 = smul.addr %s140, 4
      %s142 = scalar_lea.vmem %s0, %s141
      %p143 = pneg %p48
      %p144 = pneg %p45
      %p145 = pneg %p69
      %p146 = pneg %p66
      %p147 = pneg %p97
      %p148 = pneg %p94
      %p149 = scmp.lt.s32.totalorder %s17, 1
      %s150 = scalar_select %p149, %s17, 1
      %p151 = scmp.lt.s32.totalorder %s18, 0
      %s152 = scalar_select %p151, %s18, 0
      %s153 = sadd.s32 %s152, %s150
      %s154 = smul.addr %s153, 2
      %s155 = scalar_lea.vmem %s2, %s154
      %p156 = scmp.lt.s32.totalorder %s17, 1
      %s157 = scalar_select %p156, %s17, 1
      %p158 = scmp.lt.s32.totalorder %s18, 0
      %s159 = scalar_select %p158, %s18, 0
      %s160 = sadd.s32 %s159, %s157
      %s161 = smul.addr %s160, 4
      %s162 = scalar_lea.vmem %s0, %s161
      %p163 = scmp.lt.s32.totalorder %s17, 1
      %s164 = scalar_select %p163, %s17, 1
      %p165 = scmp.lt.s32.totalorder %s18, 0
      %s166 = scalar_select %p165, %s18, 0
      %s167 = sadd.s32 %s166, %s164
      %s168 = smul.addr %s167, 2
      %s169 = scalar_lea.vmem %s2, %s168
      %v170 = vld [vmem:[%s162] sm:$0xf]
      %v171 = vld [vmem:[%s1] sm:$0xff]
      %v172 = vld [vmem:[%s1 + $0x8] sm:$0xf]
      %v173 = vld [vmem:[%s1 + $0x10] sm:$0x3]
      %175 = vset.pattern.permute.xlu0 0
      %176 = vperm.xlu0 %175, %v171
      %v177 = vpop.permute.xlu0 %176
      %v179 = vlaneseq
      %v180 = vshrl.u32 %v179, 7
      %v181 = vsub.s32 0, %v180
      %v182 = vrot.slane %v170, %v181
      %v183 = vmul.f32 %v177, %v182
      %184 = vset.pattern.permute.xlu0 1
      %185 = vperm.xlu0 %184, %v171
      %v186 = vpop.permute.xlu0 %185
      %v188 = vlaneseq
      %v189 = vshrl.u32 %v188, 7
      %v190 = vsub.s32 1, %v189
      %v191 = vrot.slane %v170, %v190
      %v192 = vmul.f32 %v186, %v191
      %v193 = vadd.f32 %v183, %v192
      %194 = vset.pattern.permute.xlu0 2
      %195 = vperm.xlu0 %194, %v171
      %v196 = vpop.permute.xlu0 %195
      %v198 = vlaneseq
      %v199 = vshrl.u32 %v198, 7
      %v200 = vsub.s32 2, %v199
      %v201 = vrot.slane %v170, %v200
      %v202 = vmul.f32 %v196, %v201
      %v203 = vadd.f32 %v193, %v202
      %204 = vset.pattern.permute.xlu0 3
      %205 = vperm.xlu0 %204, %v171
      %v206 = vpop.permute.xlu0 %205
      %v208 = vlaneseq
      %v209 = vshrl.u32 %v208, 7
      %v210 = vsub.s32 3, %v209
      %v211 = vrot.slane %v170, %v210
      %v212 = vmul.f32 %v206, %v211
      %v213 = vadd.f32 %v203, %v212
      %214 = vset.pattern.permute.xlu0 4
      %215 = vperm.xlu0 %214, %v171
      %v216 = vpop.permute.xlu0 %215
      %v218 = vadd.f32 %v213, %v216
      %220 = vset.pattern.permute.xlu0 0
      %221 = vperm.xlu0 %220, %v172
      %v222 = vpop.permute.xlu0 %221
      %v224 = vlaneseq
      %v225 = vshrl.u32 %v224, 7
      %v226 = vsub.s32 0, %v225
      %v227 = vrot.slane %v218, %v226
      %v228 = vmul.f32 %v222, %v227
      %229 = vset.pattern.permute.xlu0 1
      %230 = vperm.xlu0 %229, %v172
      %v231 = vpop.permute.xlu0 %230
      %v233 = vlaneseq
      %v234 = vshrl.u32 %v233, 7
      %v235 = vsub.s32 1, %v234
      %v236 = vrot.slane %v218, %v235
      %v237 = vmul.f32 %v231, %v236
      %v238 = vadd.f32 %v228, %v237
      %239 = vset.pattern.permute.xlu0 2
      %240 = vperm.xlu0 %239, %v172
      %v241 = vpop.permute.xlu0 %240
      %v243 = vlaneseq
      %v244 = vshrl.u32 %v243, 7
      %v245 = vsub.s32 2, %v244
      %v246 = vrot.slane %v218, %v245
      %v247 = vmul.f32 %v241, %v246
      %v248 = vadd.f32 %v238, %v247
      %249 = vset.pattern.permute.xlu0 3
      %250 = vperm.xlu0 %249, %v172
      %v251 = vpop.permute.xlu0 %250
      %v253 = vlaneseq
      %v254 = vshrl.u32 %v253, 7
      %v255 = vsub.s32 3, %v254
      %v256 = vrot.slane %v218, %v255
      %v257 = vmul.f32 %v251, %v256
      %v258 = vadd.f32 %v248, %v257
      %259 = vset.pattern.permute.xlu0 4
      %260 = vperm.xlu0 %259, %v172
      %v261 = vpop.permute.xlu0 %260
      %v263 = vlaneseq
      %v264 = vshrl.u32 %v263, 7
      %v265 = vsub.s32 4, %v264
      %v266 = vrot.slane %v218, %v265
      %v267 = vmul.f32 %v261, %v266
      %v268 = vadd.f32 %v258, %v267
      %269 = vset.pattern.permute.xlu0 5
      %270 = vperm.xlu0 %269, %v172
      %v271 = vpop.permute.xlu0 %270
      %v273 = vlaneseq
      %v274 = vshrl.u32 %v273, 7
      %v275 = vsub.s32 5, %v274
      %v276 = vrot.slane %v218, %v275
      %v277 = vmul.f32 %v271, %v276
      %v278 = vadd.f32 %v268, %v277
      %279 = vset.pattern.permute.xlu0 6
      %280 = vperm.xlu0 %279, %v172
      %v281 = vpop.permute.xlu0 %280
      %v283 = vlaneseq
      %v284 = vshrl.u32 %v283, 7
      %v285 = vsub.s32 6, %v284
      %v286 = vrot.slane %v218, %v285
      %v287 = vmul.f32 %v281, %v286
      %v288 = vadd.f32 %v278, %v287
      %289 = vset.pattern.permute.xlu0 7
      %290 = vperm.xlu0 %289, %v172
      %v291 = vpop.permute.xlu0 %290
      %v293 = vlaneseq
      %v294 = vshrl.u32 %v293, 7
      %v295 = vsub.s32 7, %v294
      %v296 = vrot.slane %v218, %v295
      %v297 = vmul.f32 %v291, %v296
      %v298 = vadd.f32 %v288, %v297
      %299 = vset.pattern.permute.xlu0 8
      %300 = vperm.xlu0 %299, %v172
      %v301 = vpop.permute.xlu0 %300
      %v303 = vadd.f32 %v298, %v301
      %305 = vset.pattern.permute.xlu0 0
      %306 = vperm.xlu0 %305, %v173
      %v307 = vpop.permute.xlu0 %306
      %v309 = vlaneseq
      %v310 = vshrl.u32 %v309, 7
      %v311 = vsub.s32 0, %v310
      %v312 = vrot.slane %v303, %v311
      %v313 = vmul.f32 %v307, %v312
      %314 = vset.pattern.permute.xlu0 1
      %315 = vperm.xlu0 %314, %v173
      %v316 = vpop.permute.xlu0 %315
      %v318 = vlaneseq
      %v319 = vshrl.u32 %v318, 7
      %v320 = vsub.s32 1, %v319
      %v321 = vrot.slane %v303, %v320
      %v322 = vmul.f32 %v316, %v321
      %v323 = vadd.f32 %v313, %v322
      %324 = vset.pattern.permute.xlu0 2
      %325 = vperm.xlu0 %324, %v173
      %v326 = vpop.permute.xlu0 %325
      %v328 = vlaneseq
      %v329 = vshrl.u32 %v328, 7
      %v330 = vsub.s32 2, %v329
      %v331 = vrot.slane %v303, %v330
      %v332 = vmul.f32 %v326, %v331
      %v333 = vadd.f32 %v323, %v332
      %334 = vset.pattern.permute.xlu0 3
      %335 = vperm.xlu0 %334, %v173
      %v336 = vpop.permute.xlu0 %335
      %v338 = vlaneseq
      %v339 = vshrl.u32 %v338, 7
      %v340 = vsub.s32 3, %v339
      %v341 = vrot.slane %v303, %v340
      %v342 = vmul.f32 %v336, %v341
      %v343 = vadd.f32 %v333, %v342
      %344 = vset.pattern.permute.xlu0 4
      %345 = vperm.xlu0 %344, %v173
      %v346 = vpop.permute.xlu0 %345
      %v348 = vadd.f32 %v343, %v346
      %vm349 = vcmask 123904
      %350 = vst.msk [vmem:[%s169] sm:$0x3] %vm349, %v348
      %p351 = scmp.lt.s32.totalorder %s17, 1
      %s352 = scalar_select %p351, %s17, 1
      %p353 = scmp.lt.s32.totalorder %s18, 0
      %s354 = scalar_select %p353, %s18, 0
      %s355 = sadd.s32 %s354, %s352
      %s356 = smul.addr %s355, 2
      %s357 = scalar_lea.vmem %s2, %s356
      // Predicated region
      $region29: #{small_conv_net_forward.1} parent=27 // pred_check
        %p358 = pneg %p94
      $region30: #{small_conv_net_forward.1} parent=27 // pred_check_branch
        %360 = sbr.rel (%p358) target = $region32
      $region31: #{small_conv_net_forward.1} parent=27 // pred_region
        _
      $region32: #{small_conv_net_forward.1} parent=27 // pred_fallthru
        _
    $region28: #{small_conv_net_forward.1} parent=5 // pred_fallthru
      _
    %p361 = scmp.le.s32.totalorder 2, %s8
    // Predicated region
    $region33: #{small_conv_net_forward.1} parent=5 // pred_check
      %p362 = pneg %p361
    $region34: #{small_conv_net_forward.1} parent=5 // pred_check_branch
      %364 = sbr.rel (%p362) target = $region36
    $region35: #{small_conv_net_forward.1} parent=5 // pred_region
      %s365 = ssub.s32 %s8, 2
      // Predicated region
      $region37: #{small_conv_net_forward.1} parent=35 // pred_check
        %p366 = pneg %p100
      $region38: #{small_conv_net_forward.1} parent=35 // pred_check_branch
        %368 = sbr.rel (%p366) target = $region40
      $region39: #{small_conv_net_forward.1} parent=35 // pred_region
        %p369 = scmp.lt.s32.totalorder %s19, 1
        %s370 = scalar_select %p369, %s19, 1
        %p371 = scmp.lt.s32.totalorder %s20, 0
        %s372 = scalar_select %p371, %s20, 0
        %s373 = sadd.s32 %s372, %s370
        %s374 = smul.addr %s373, 2
        %s375 = scalar_lea.vmem %s2, %s374
      $region40: #{small_conv_net_forward.1} parent=35 // pred_fallthru
        _
    $region36: #{small_conv_net_forward.1} parent=5 // pred_fallthru
      _
  $region6: #{small_conv_net_forward.1} parent=0 // loop_footer
    %s12 = sadd.s32 1, %s8
  $region7: #{small_conv_net_forward.1} parent=0 // loop_footer_branch
    %7 = sbr.rel target = $region3
  $region8: #{small_conv_net_forward.1} parent=0 // loop_exit
    _

</llo_original>
